<compile_context>
chip_gen: v7x
topology: tpu7x:2x2x1
jax: 0.10.0
libtpu: 0.0.40
codegen_flags: <defaults>
</compile_context>

<pallas_src>
import jax
import jax.numpy as jnp
import numpy as np
from jax.experimental import pallas as pl
from jax.experimental.pallas import tpu as pltpu

BN_EPS = 1e-5


def mcd_c_kernel(x_ref, w1_ref, b1_ref, w2_ref, b2_ref, w3_ref, b3_ref, o_ref):
    """Fused (Linear+BN-folded)->ReLU x2 -> Linear for one batch tile."""
    x = x_ref[...]

    h = jnp.dot(x, w1_ref[...], preferred_element_type=jnp.float32) + b1_ref[...]
    h = jnp.maximum(h, 0.0)

    h = jnp.dot(h, w2_ref[...], preferred_element_type=jnp.float32) + b2_ref[...]
    h = jnp.maximum(h, 0.0)

    out = jnp.dot(h, w3_ref[...], preferred_element_type=jnp.float32) + b3_ref[...]
    o_ref[...] = out.astype(o_ref.dtype)


def mcd_c_forward(x, params, *, block_b=128):
    """Wrapper: fold BN into weights, tile the batch, pad output lanes."""
    (w1, b1, g1, be1, m1, v1,
     w2, b2, g2, be2, m2, v2,
     w3, b3) = params

    # --- fold inference BatchNorm into the preceding Linear layers ---
    s1 = g1 * jax.lax.rsqrt(v1 + BN_EPS)          # (1, mid)
    w1f = w1 * s1                                  # (in, mid)
    b1f = (b1 - m1) * s1 + be1                     # (1, mid)
    s2 = g2 * jax.lax.rsqrt(v2 + BN_EPS)
    w2f = w2 * s2
    b2f = (b2 - m2) * s2 + be2

    B, K = x.shape
    mid = w1.shape[1]
    num_classes = w3.shape[1]

    # --- lane-dense final layer: pad output width to a multiple of 128 ---
    n_pad = max(128, ((num_classes + 127) // 128) * 128)
    w3p = jnp.zeros((mid, n_pad), w3.dtype).at[:, :num_classes].set(w3)
    b3p = jnp.zeros((1, n_pad), b3.dtype).at[:, :num_classes].set(b3)

    # --- batch tiling: round B up to a multiple of 8 (sublane), tile by TB ---
    tb = min(block_b, ((B + 7) // 8) * 8)
    b_pad = ((B + tb - 1) // tb) * tb
    if b_pad != B:
        x = jnp.pad(x, ((0, b_pad - B), (0, 0)))

    grid = (b_pad // tb,)

    x_spec = pl.BlockSpec((tb, K), lambda i: (i, 0))
    out_spec = pl.BlockSpec((tb, n_pad), lambda i: (i, 0))

    def resident_spec(arr):
        # weights/biases: same block for every grid step -> stay VMEM resident
        return pl.BlockSpec(arr.shape, lambda i: (0, 0))

    out = pl.pallas_call(
        mcd_c_kernel,
        out_shape=jax.ShapeDtypeStruct((b_pad, n_pad), jnp.float32),
        grid=grid,
        in_specs=[x_spec,
                  resident_spec(w1f), resident_spec(b1f),
                  resident_spec(w2f), resident_spec(b2f),
                  resident_spec(w3p), resident_spec(b3p)],
        out_specs=out_spec,
        compiler_params=pltpu.CompilerParams(
            dimension_semantics=("parallel",),
            vmem_limit_bytes=8 << 20),
    )(x, w1f, b1f, w2f, b2f, w3p, b3p)

    return out[:B, :num_classes]


def init_params(key, num_unit=512, middle=128, num_classes=8):
    """Deterministic synthetic parameters (PyTorch-default-ish init).

    BN running stats / affine params are made non-trivial so the BN-folding
    path is actually exercised by the correctness check.
    """
    ks = jax.random.split(key, 12)

    def linear_init(kw, kb, fan_in, fan_out):
        bound = 1.0 / np.sqrt(fan_in)
        w = jax.random.uniform(kw, (fan_in, fan_out), jnp.float32, -bound, bound)
        b = jax.random.uniform(kb, (1, fan_out), jnp.float32, -bound, bound)
        return w, b

    w1, b1 = linear_init(ks[0], ks[1], num_unit, middle)
    w2, b2 = linear_init(ks[2], ks[3], middle, middle)
    w3, b3 = linear_init(ks[4], ks[5], middle, num_classes)

    g1 = 1.0 + 0.1 * jax.random.normal(ks[6], (1, middle), jnp.float32)
    be1 = 0.1 * jax.random.normal(ks[7], (1, middle), jnp.float32)
    m1 = 0.1 * jax.random.normal(ks[8], (1, middle), jnp.float32)
    v1 = 1.0 + 0.1 * jax.random.uniform(ks[9], (1, middle), jnp.float32)

    g2 = 1.0 + 0.1 * jax.random.normal(ks[10], (1, middle), jnp.float32)
    be2 = 0.1 * jax.random.normal(ks[11], (1, middle), jnp.float32)
    m2 = jnp.zeros((1, middle), jnp.float32)
    v2 = jnp.ones((1, middle), jnp.float32)

    return (w1, b1, g1, be1, m1, v1,
            w2, b2, g2, be2, m2, v2,
            w3, b3)


def mcd_c_reference(x, params):
    """Pure-JAX reference of the original (unfolded) forward."""
    (w1, b1, g1, be1, m1, v1,
     w2, b2, g2, be2, m2, v2,
     w3, b3) = params
    h = x @ w1 + b1
    h = (h - m1) / jnp.sqrt(v1 + BN_EPS) * g1 + be1
    h = jnp.maximum(h, 0.0)
    h = h @ w2 + b2
    h = (h - m2) / jnp.sqrt(v2 + BN_EPS) * g2 + be2
    h = jnp.maximum(h, 0.0)
    return h @ w3 + b3


if __name__ == "__main__":
    # TODO(synk): training-mode Dropout and the grad_reverse backward pass are
    # not part of the inference forward path; they are identity here.
    key = jax.random.PRNGKey(0)
    k_x, k_p = jax.random.split(key)

    B, NUM_UNIT, MIDDLE, NUM_CLASSES = 8, 512, 128, 8
    x = jax.random.normal(k_x, (B, NUM_UNIT), jnp.float32)
    params = init_params(k_p, NUM_UNIT, MIDDLE, NUM_CLASSES)

    out = mcd_c_forward(x, params)
    out = jax.block_until_ready(out)

    ref = mcd_c_reference(x, params)
    np.testing.assert_allclose(np.asarray(out), np.asarray(ref),
                               rtol=1e-4, atol=1e-4)

    print("KERNEL_OK")
</pallas_src>

<mosaic_0001>
module attributes {stable_mosaic.version = 11 : i64} {
  func.func @mcd_c_kernel(%arg0: i32, %arg1: memref<8x512xf32, #tpu.memory_space<vmem>>, %arg2: memref<512x128xf32, #tpu.memory_space<vmem>>, %arg3: memref<1x128xf32, #tpu.memory_space<vmem>>, %arg4: memref<128x128xf32, #tpu.memory_space<vmem>>, %arg5: memref<1x128xf32, #tpu.memory_space<vmem>>, %arg6: memref<128x128xf32, #tpu.memory_space<vmem>>, %arg7: memref<1x128xf32, #tpu.memory_space<vmem>>, %arg8: memref<8x128xf32, #tpu.memory_space<vmem>>) attributes {dimension_semantics = [#tpu.dimension_semantics<parallel>], iteration_bounds = array<i64: 1>, scalar_prefetch = 0 : i64, scratch_operands = 0 : i64, tpu.core_type = #tpu.core_type<tc>, window_params = [{transform_indices = @transform_0, window_bounds = array<i64: 8, 512>}, {pipeline_mode = #tpu.pipeline_mode<synchronous>, transform_indices = @transform_1, window_bounds = array<i64: 512, 128>}, {pipeline_mode = #tpu.pipeline_mode<synchronous>, transform_indices = @transform_2, window_bounds = array<i64: 1, 128>}, {pipeline_mode = #tpu.pipeline_mode<synchronous>, transform_indices = @transform_3, window_bounds = array<i64: 128, 128>}, {pipeline_mode = #tpu.pipeline_mode<synchronous>, transform_indices = @transform_4, window_bounds = array<i64: 1, 128>}, {pipeline_mode = #tpu.pipeline_mode<synchronous>, transform_indices = @transform_5, window_bounds = array<i64: 128, 128>}, {pipeline_mode = #tpu.pipeline_mode<synchronous>, transform_indices = @transform_6, window_bounds = array<i64: 1, 128>}, {transform_indices = @transform_7, window_bounds = array<i64: 8, 128>}]} {
    %c0 = arith.constant 0 : index
    %c0_0 = arith.constant 0 : index
    %0 = vector.load %arg1[%c0, %c0_0] : memref<8x512xf32, #tpu.memory_space<vmem>>, vector<8x512xf32>
    %c0_1 = arith.constant 0 : index
    %c0_2 = arith.constant 0 : index
    %1 = vector.load %arg2[%c0_1, %c0_2] : memref<512x128xf32, #tpu.memory_space<vmem>>, vector<512x128xf32>
    %cst = arith.constant dense<0.000000e+00> : vector<8x128xf32>
    %2 = tpu.matmul %0, %1, %cst {dimension_numbers = #tpu.dot_dimension_numbers<[1], [0], [0], [1], [0, 0, 1, 1], [], []>} : vector<8x512xf32>, vector<512x128xf32>, vector<8x128xf32> -> vector<8x128xf32>
    %c0_3 = arith.constant 0 : index
    %c0_4 = arith.constant 0 : index
    %3 = vector.load %arg3[%c0_3, %c0_4] : memref<1x128xf32, #tpu.memory_space<vmem>>, vector<1x128xf32>
    %4 = vector.broadcast %3 : vector<1x128xf32> to vector<8x128xf32>
    %5 = arith.addf %2, %4 : vector<8x128xf32>
    %cst_5 = arith.constant 0.000000e+00 : f32
    %6 = vector.broadcast %cst_5 : f32 to vector<8x128xf32>
    %7 = arith.maximumf %5, %6 : vector<8x128xf32>
    %c0_6 = arith.constant 0 : index
    %c0_7 = arith.constant 0 : index
    %8 = vector.load %arg4[%c0_6, %c0_7] : memref<128x128xf32, #tpu.memory_space<vmem>>, vector<128x128xf32>
    %cst_8 = arith.constant dense<0.000000e+00> : vector<8x128xf32>
    %9 = tpu.matmul %7, %8, %cst_8 {dimension_numbers = #tpu.dot_dimension_numbers<[1], [0], [0], [1], [0, 0, 1, 1], [], []>} : vector<8x128xf32>, vector<128x128xf32>, vector<8x128xf32> -> vector<8x128xf32>
    %c0_9 = arith.constant 0 : index
    %c0_10 = arith.constant 0 : index
    %10 = vector.load %arg5[%c0_9, %c0_10] : memref<1x128xf32, #tpu.memory_space<vmem>>, vector<1x128xf32>
    %11 = vector.broadcast %10 : vector<1x128xf32> to vector<8x128xf32>
    %12 = arith.addf %9, %11 : vector<8x128xf32>
    %cst_11 = arith.constant 0.000000e+00 : f32
    %13 = vector.broadcast %cst_11 : f32 to vector<8x128xf32>
    %14 = arith.maximumf %12, %13 : vector<8x128xf32>
    %c0_12 = arith.constant 0 : index
    %c0_13 = arith.constant 0 : index
    %15 = vector.load %arg6[%c0_12, %c0_13] : memref<128x128xf32, #tpu.memory_space<vmem>>, vector<128x128xf32>
    %cst_14 = arith.constant dense<0.000000e+00> : vector<8x128xf32>
    %16 = tpu.matmul %14, %15, %cst_14 {dimension_numbers = #tpu.dot_dimension_numbers<[1], [0], [0], [1], [0, 0, 1, 1], [], []>} : vector<8x128xf32>, vector<128x128xf32>, vector<8x128xf32> -> vector<8x128xf32>
    %c0_15 = arith.constant 0 : index
    %c0_16 = arith.constant 0 : index
    %17 = vector.load %arg7[%c0_15, %c0_16] : memref<1x128xf32, #tpu.memory_space<vmem>>, vector<1x128xf32>
    %18 = vector.broadcast %17 : vector<1x128xf32> to vector<8x128xf32>
    %19 = arith.addf %16, %18 : vector<8x128xf32>
    %c0_17 = arith.constant 0 : index
    %c0_18 = arith.constant 0 : index
    %20 = vector.load %arg8[%c0_17, %c0_18] : memref<8x128xf32, #tpu.memory_space<vmem>>, vector<8x128xf32>
    tpu.vector_store %arg8[%c0_17, %c0_18], %19 {strides = array<i32>} : memref<8x128xf32, #tpu.memory_space<vmem>>, vector<8x128xf32>,
    return
  }
  func.func @transform_0(%arg0: i32) -> (i32, i32) {
    %c0_i32 = arith.constant 0 : i32
    %c0_i32_0 = arith.constant 0 : i32
    return %arg0, %c0_i32 : i32, i32
  }
  func.func @transform_1(%arg0: i32) -> (i32, i32) {
    %c0_i32 = arith.constant 0 : i32
    %c0_i32_0 = arith.constant 0 : i32
    %c0_i32_1 = arith.constant 0 : i32
    return %c0_i32, %c0_i32_0 : i32, i32
  }
  func.func @transform_2(%arg0: i32) -> (i32, i32) {
    %c0_i32 = arith.constant 0 : i32
    %c0_i32_0 = arith.constant 0 : i32
    %c0_i32_1 = arith.constant 0 : i32
    return %c0_i32, %c0_i32_0 : i32, i32
  }
  func.func @transform_3(%arg0: i32) -> (i32, i32) {
    %c0_i32 = arith.constant 0 : i32
    %c0_i32_0 = arith.constant 0 : i32
    %c0_i32_1 = arith.constant 0 : i32
    return %c0_i32, %c0_i32_0 : i32, i32
  }
  func.func @transform_4(%arg0: i32) -> (i32, i32) {
    %c0_i32 = arith.constant 0 : i32
    %c0_i32_0 = arith.constant 0 : i32
    %c0_i32_1 = arith.constant 0 : i32
    return %c0_i32, %c0_i32_0 : i32, i32
  }
  func.func @transform_5(%arg0: i32) -> (i32, i32) {
    %c0_i32 = arith.constant 0 : i32
    %c0_i32_0 = arith.constant 0 : i32
    %c0_i32_1 = arith.constant 0 : i32
    return %c0_i32, %c0_i32_0 : i32, i32
  }
  func.func @transform_6(%arg0: i32) -> (i32, i32) {
    %c0_i32 = arith.constant 0 : i32
    %c0_i32_0 = arith.constant 0 : i32
    %c0_i32_1 = arith.constant 0 : i32
    return %c0_i32, %c0_i32_0 : i32, i32
  }
  func.func @transform_7(%arg0: i32) -> (i32, i32) {
    %c0_i32 = arith.constant 0 : i32
    %c0_i32_0 = arith.constant 0 : i32
    return %arg0, %c0_i32 : i32, i32
  }
}

</mosaic_0001>

<llo_original>
// kernel: tpu_custom_call.1
$region0: #{tpu_custom_call.1}
  #allocation0 [shape = 'u32[]', space=smem, size = 0x4, offset = 0x4, fixed_abs, tag = 'smem constant byte address 0x4 - core index']
  #allocation1 [shape = 'u32[144,128]{1,0:T(1,128)}', space=vmem, size = 0x12000, scoped, tag = 'internal scratch']
  %s0 = inlined_call_operand.hbm [shape: f32[8,512], index: 0, kind: input, shape index: {}]
  %s1 = inlined_call_operand.hbm [shape: f32[512,128], index: 1, kind: input, shape index: {}]
  %s2 = inlined_call_operand.vmem [shape: f32[1,128], index: 2, kind: input, shape index: {}]
  %s3 = inlined_call_operand.hbm [shape: f32[128,128], index: 3, kind: input, shape index: {}]
  %s4 = inlined_call_operand.vmem [shape: f32[1,128], index: 4, kind: input, shape index: {}]
  %s5 = inlined_call_operand.hbm [shape: f32[128,128], index: 5, kind: input, shape index: {}]
  %s6 = inlined_call_operand.vmem [shape: f32[1,128], index: 6, kind: input, shape index: {}]
  %s7 = inlined_call_operand.hbm [shape: f32[8,128], index: 7, kind: output, shape index: {}]
  %s8 = sld [smem:[#allocation0]]
  $region54: #{tpu_custom_call.1} parent=0
    _
  %s10 = ssub.s32 1, %s8
  %s11 = scalar_select 0, %s10, %s8
  $region1: #{tpu_custom_call.1} parent=0
    #allocation2 [shape = 'u8[16384]{0}', space=vmem, size = 0x4000, scoped, tag = 'input window, operand 0, single buffered']
    #allocation3 [shape = 's32[1]{0}', space=sflag, size = 0x4, scoped, tag = 'scoped memory for tpu_custom_call.1']
    #allocation4 [shape = 's32[1]{0}', space=sflag, size = 0x4, scoped, tag = 'scoped memory for tpu_custom_call.1']
    #allocation5 [shape = 'u8[262144]{0}', space=vmem, size = 0x40000, scoped, tag = 'input window, operand 1, single buffered']
    #allocation6 [shape = 's32[1]{0}', space=sflag, size = 0x4, scoped, tag = 'scoped memory for tpu_custom_call.1']
    #allocation7 [shape = 'u8[65536]{0}', space=vmem, size = 0x10000, scoped, tag = 'input window, operand 3, single buffered']
    #allocation8 [shape = 'u8[65536]{0}', space=vmem, size = 0x10000, scoped, tag = 'input window, operand 5, single buffered']
    #allocation9 [shape = 's32[1]{0}', space=sflag, size = 0x4, scoped, tag = 'scoped memory for tpu_custom_call.1']
    #allocation10 [shape = 'u8[4096]{0}', space=vmem, size = 0x1000, scoped, tag = 'output window, operand 0, single buffered']
    %12 = vsyncpa [#allocation3], 0
    %13 = vsyncpa [#allocation6], 0
    %14 = vsyncpa [#allocation9], 0
    %15 = vsyncpa [#allocation4], 0
    // Predicated region
    $region2: #{tpu_custom_call.1} parent=1 // pred_check
      _
    $region3: #{tpu_custom_call.1} parent=1 // pred_check_branch
      %17 = sbr.rel (0) target = $region5
    $region4: #{tpu_custom_call.1} parent=1 // pred_region
      %s19 = ssub.s32 512, 512
      %20 = vsyncadd [#allocation3], %s19
      %s22 = sshll.u32 [#allocation2], 4
      %s23 = int_to_ptr.vmem [resolvable:$true] %s22
      %25 = dma.hbm_to_vmem [thread:$0]  %s0, 512, %s23, [#allocation3]
    $region5: #{tpu_custom_call.1} parent=1 // pred_fallthru
      _
    // Predicated region
    $region6: #{tpu_custom_call.1} parent=1 // pred_check
      _
    $region7: #{tpu_custom_call.1} parent=1 // pred_check_branch
      %27 = sbr.rel (0) target = $region9
    $region8: #{tpu_custom_call.1} parent=1 // pred_region
      %s29 = ssub.s32 8192, 8192
      %30 = vsyncadd [#allocation6], %s29
      %s31 = sshll.u32 [#allocation5], 4
      %s32 = int_to_ptr.vmem [resolvable:$true] %s31
      %37 = dma.hbm_to_vmem [thread:$0]  %s1, 8192, %s32, [#allocation6], 128, 128, 8
    $region9: #{tpu_custom_call.1} parent=1 // pred_fallthru
      _
    // Predicated region
    $region10: #{tpu_custom_call.1} parent=1 // pred_check
      _
    $region11: #{tpu_custom_call.1} parent=1 // pred_check_branch
      %39 = sbr.rel (0) target = $region13
    $region12: #{tpu_custom_call.1} parent=1 // pred_region
      _
    $region13: #{tpu_custom_call.1} parent=1 // pred_fallthru
      _
    // Predicated region
    $region14: #{tpu_custom_call.1} parent=1 // pred_check
      _
    $region15: #{tpu_custom_call.1} parent=1 // pred_check_branch
      %41 = sbr.rel (0) target = $region17
    $region16: #{tpu_custom_call.1} parent=1 // pred_region
      %s43 = ssub.s32 2048, 2048
      %44 = vsyncadd [#allocation6], %s43
      %s45 = sshll.u32 [#allocation7], 4
      %s46 = int_to_ptr.vmem [resolvable:$true] %s45
      %51 = dma.hbm_to_vmem [thread:$0]  %s3, 2048, %s46, [#allocation6], 128, 128, 8
    $region17: #{tpu_custom_call.1} parent=1 // pred_fallthru
      _
    // Predicated region
    $region18: #{tpu_custom_call.1} parent=1 // pred_check
      _
    $region19: #{tpu_custom_call.1} parent=1 // pred_check_branch
      %53 = sbr.rel (0) target = $region21
    $region20: #{tpu_custom_call.1} parent=1 // pred_region
      _
    $region21: #{tpu_custom_call.1} parent=1 // pred_fallthru
      _
    // Predicated region
    $region22: #{tpu_custom_call.1} parent=1 // pred_check
      _
    $region23: #{tpu_custom_call.1} parent=1 // pred_check_branch
      %55 = sbr.rel (0) target = $region25
    $region24: #{tpu_custom_call.1} parent=1 // pred_region
      %s57 = ssub.s32 2048, 2048
      %58 = vsyncadd [#allocation9], %s57
      %s59 = sshll.u32 [#allocation8], 4
      %s60 = int_to_ptr.vmem [resolvable:$true] %s59
      %65 = dma.hbm_to_vmem [thread:$0]  %s5, 2048, %s60, [#allocation9], 128, 128, 8
    $region25: #{tpu_custom_call.1} parent=1 // pred_fallthru
      _
    // Predicated region
    $region26: #{tpu_custom_call.1} parent=1 // pred_check
      _
    $region27: #{tpu_custom_call.1} parent=1 // pred_check_branch
      %67 = sbr.rel (0) target = $region29
    $region28: #{tpu_custom_call.1} parent=1 // pred_region
      _
    $region29: #{tpu_custom_call.1} parent=1 // pred_fallthru
      _
    // Predicated region
    $region30: #{tpu_custom_call.1} parent=1 // pred_check
      _
    $region31: #{tpu_custom_call.1} parent=1 // pred_check_branch
      %69 = sbr.rel (0) target = $region33
    $region32: #{tpu_custom_call.1} parent=1 // pred_region
      %70 = dma.done [#allocation3], 512
    $region33: #{tpu_custom_call.1} parent=1 // pred_fallthru
      _
    // Predicated region
    $region34: #{tpu_custom_call.1} parent=1 // pred_check
      _
    $region35: #{tpu_custom_call.1} parent=1 // pred_check_branch
      %72 = sbr.rel (0) target = $region37
    $region36: #{tpu_custom_call.1} parent=1 // pred_region
      %73 = dma.done [#allocation6], 8192
    $region37: #{tpu_custom_call.1} parent=1 // pred_fallthru
      _
    // Predicated region
    $region38: #{tpu_custom_call.1} parent=1 // pred_check
      _
    $region39: #{tpu_custom_call.1} parent=1 // pred_check_branch
      %75 = sbr.rel (0) target = $region41
    $region40: #{tpu_custom_call.1} parent=1 // pred_region
      %76 = dma.done [#allocation6], 2048
    $region41: #{tpu_custom_call.1} parent=1 // pred_fallthru
      _
    // Predicated region
    $region42: #{tpu_custom_call.1} parent=1 // pred_check
      _
    $region43: #{tpu_custom_call.1} parent=1 // pred_check_branch
      %78 = sbr.rel (0) target = $region45
    $region44: #{tpu_custom_call.1} parent=1 // pred_region
      %79 = dma.done [#allocation9], 2048
    $region45: #{tpu_custom_call.1} parent=1 // pred_fallthru
      _
    %v80 = vld [vmem:[#allocation2] sm:$0xff]
    %v81 = vld [vmem:[#allocation2 + $0x8] sm:$0xff]
    %v82 = vld [vmem:[#allocation2 + $0x10] sm:$0xff]
    %v83 = vld [vmem:[#allocation2 + $0x18] sm:$0xff]
    %v84 = vld [vmem:[#allocation5] sm:$0xff]
    %v85 = vld [vmem:[#allocation5 + $0x8] sm:$0xff]
    %v86 = vld [vmem:[#allocation5 + $0x10] sm:$0xff]
    %v87 = vld [vmem:[#allocation5 + $0x18] sm:$0xff]
    %v88 = vld [vmem:[#allocation5 + $0x20] sm:$0xff]
    %v89 = vld [vmem:[#allocation5 + $0x28] sm:$0xff]
    %v90 = vld [vmem:[#allocation5 + $0x30] sm:$0xff]
    %v91 = vld [vmem:[#allocation5 + $0x38] sm:$0xff]
    %v92 = vld [vmem:[#allocation5 + $0x40] sm:$0xff]
    %v93 = vld [vmem:[#allocation5 + $0x48] sm:$0xff]
    %v94 = vld [vmem:[#allocation5 + $0x50] sm:$0xff]
    %v95 = vld [vmem:[#allocation5 + $0x58] sm:$0xff]
    %v96 = vld [vmem:[#allocation5 + $0x60] sm:$0xff]
    %v97 = vld [vmem:[#allocation5 + $0x68] sm:$0xff]
    %v98 = vld [vmem:[#allocation5 + $0x70] sm:$0xff]
    %v99 = vld [vmem:[#allocation5 + $0x78] sm:$0xff]
    %v100 = vld [vmem:[#allocation5 + $0x80] sm:$0xff]
    %v101 = vld [vmem:[#allocation5 + $0x88] sm:$0xff]
    %v102 = vld [vmem:[#allocation5 + $0x90] sm:$0xff]
    %v103 = vld [vmem:[#allocation5 + $0x98] sm:$0xff]
    %v104 = vld [vmem:[#allocation5 + $0xa0] sm:$0xff]
    %v105 = vld [vmem:[#allocation5 + $0xa8] sm:$0xff]
    %v106 = vld [vmem:[#allocation5 + $0xb0] sm:$0xff]
    %v107 = vld [vmem:[#allocation5 + $0xb8] sm:$0xff]
    %v108 = vld [vmem:[#allocation5 + $0xc0] sm:$0xff]
    %v109 = vld [vmem:[#allocation5 + $0xc8] sm:$0xff]
    %v110 = vld [vmem:[#allocation5 + $0xd0] sm:$0xff]
    %v111 = vld [vmem:[#allocation5 + $0xd8] sm:$0xff]
    %v112 = vld [vmem:[#allocation5 + $0xe0] sm:$0xff]
    %v113 = vld [vmem:[#allocation5 + $0xe8] sm:$0xff]
    %v114 = vld [vmem:[#allocation5 + $0xf0] sm:$0xff]
    %v115 = vld [vmem:[#allocation5 + $0xf8] sm:$0xff]
    %v116 = vld [vmem:[#allocation5 + $0x100] sm:$0xff]
    %v117 = vld [vmem:[#allocation5 + $0x108] sm:$0xff]
    %v118 = vld [vmem:[#allocation5 + $0x110] sm:$0xff]
    %v119 = vld [vmem:[#allocation5 + $0x118] sm:$0xff]
    %v120 = vld [vmem:[#allocation5 + $0x120] sm:$0xff]
    %v121 = vld [vmem:[#allocation5 + $0x128] sm:$0xff]
    %v122 = vld [vmem:[#allocation5 + $0x130] sm:$0xff]
    %v123 = vld [vmem:[#allocation5 + $0x138] sm:$0xff]
    %v124 = vld [vmem:[#allocation5 + $0x140] sm:$0xff]
    %v125 = vld [vmem:[#allocation5 + $0x148] sm:$0xff]
    %v126 = vld [vmem:[#allocation5 + $0x150] sm:$0xff]
    %v127 = vld [vmem:[#allocation5 + $0x158] sm:$0xff]
    %v128 = vld [vmem:[#allocation5 + $0x160] sm:$0xff]
    %v129 = vld [vmem:[#allocation5 + $0x168] sm:$0xff]
    %v130 = vld [vmem:[#allocation5 + $0x170] sm:$0xff]
    %v131 = vld [vmem:[#allocation5 + $0x178] sm:$0xff]
    %v132 = vld [vmem:[#allocation5 + $0x180] sm:$0xff]
    %v133 = vld [vmem:[#allocation5 + $0x188] sm:$0xff]
    %v134 = vld [vmem:[#allocation5 + $0x190] sm:$0xff]
    %v135 = vld [vmem:[#allocation5 + $0x198] sm:$0xff]
    %v136 = vld [vmem:[#allocation5 + $0x1a0] sm:$0xff]
    %v137 = vld [vmem:[#allocation5 + $0x1a8] sm:$0xff]
    %v138 = vld [vmem:[#allocation5 + $0x1b0] sm:$0xff]
    %v139 = vld [vmem:[#allocation5 + $0x1b8] sm:$0xff]
    %v140 = vld [vmem:[#allocation5 + $0x1c0] sm:$0xff]
    %v141 = vld [vmem:[#allocation5 + $0x1c8] sm:$0xff]
    %v142 = vld [vmem:[#allocation5 + $0x1d0] sm:$0xff]
    %v143 = vld [vmem:[#allocation5 + $0x1d8] sm:$0xff]
    %v144 = vld [vmem:[#allocation5 + $0x1e0] sm:$0xff]
    %v145 = vld [vmem:[#allocation5 + $0x1e8] sm:$0xff]
    %v146 = vld [vmem:[#allocation5 + $0x1f0] sm:$0xff]
    %v147 = vld [vmem:[#allocation5 + $0x1f8] sm:$0xff]
    %v148 = vld [vmem:[%s2] sm:$0x1]
    %v150 = vlaneseq
    %v151 = vshrl.u32 %v150, 7
    %v152 = vsub.s32 0, %v151
    %v153 = vrot.slane %v148, %v152
    %155 = vmatprep.subr.mxu0 0.0
    %156 = vmatpush1.msra.mxu0 %v84
    %157 = vmatprep.subr.mxu0 0.0
    %158 = vmatpush1.msra.mxu0 %v85
    %159 = vmatprep.subr.mxu0 0.0
    %160 = vmatpush1.msra.mxu0 %v86
    %161 = vmatprep.subr.mxu0 0.0
    %162 = vmatpush1.msra.mxu0 %v87
    %163 = vmatprep.subr.mxu0 0.0
    %164 = vmatpush1.msra.mxu0 %v88
    %165 = vmatprep.subr.mxu0 0.0
    %166 = vmatpush1.msra.mxu0 %v89
    %167 = vmatprep.subr.mxu0 0.0
    %168 = vmatpush1.msra.mxu0 %v90
    %169 = vmatprep.subr.mxu0 0.0
    %170 = vmatpush1.msra.mxu0 %v91
    %171 = vmatprep.subr.mxu0 0.0
    %172 = vmatpush1.msra.mxu0 %v92
    %173 = vmatprep.subr.mxu0 0.0
    %174 = vmatpush1.msra.mxu0 %v93
    %175 = vmatprep.subr.mxu0 0.0
    %176 = vmatpush1.msra.mxu0 %v94
    %177 = vmatprep.subr.mxu0 0.0
    %178 = vmatpush1.msra.mxu0 %v95
    %179 = vmatprep.subr.mxu0 0.0
    %180 = vmatpush1.msra.mxu0 %v96
    %181 = vmatprep.subr.mxu0 0.0
    %182 = vmatpush1.msra.mxu0 %v97
    %183 = vmatprep.subr.mxu0 0.0
    %184 = vmatpush1.msra.mxu0 %v98
    %185 = vmatprep.subr.mxu0 0.0
    %186 = vmatpush1.msra.mxu0 %v99
    %187 = vmatprep.subr.mxu0 0.0
    %188 = vmatpush1.msra.mxu0 %v100
    %189 = vmatprep.subr.mxu0 0.0
    %190 = vmatpush1.msra.mxu0 %v101
    %191 = vmatprep.subr.mxu0 0.0
    %192 = vmatpush1.msra.mxu0 %v102
    %193 = vmatprep.subr.mxu0 0.0
    %194 = vmatpush1.msra.mxu0 %v103
    %195 = vmatprep.subr.mxu0 0.0
    %196 = vmatpush1.msra.mxu0 %v104
    %197 = vmatprep.subr.mxu0 0.0
    %198 = vmatpush1.msra.mxu0 %v105
    %199 = vmatprep.subr.mxu0 0.0
    %200 = vmatpush1.msra.mxu0 %v106
    %201 = vmatprep.subr.mxu0 0.0
    %202 = vmatpush1.msra.mxu0 %v107
    %203 = vmatprep.subr.mxu0 0.0
    %204 = vmatpush1.msra.mxu0 %v108
    %205 = vmatprep.subr.mxu0 0.0
    %206 = vmatpush1.msra.mxu0 %v109
    %207 = vmatprep.subr.mxu0 0.0
    %208 = vmatpush1.msra.mxu0 %v110
    %209 = vmatprep.subr.mxu0 0.0
    %210 = vmatpush1.msra.mxu0 %v111
    %211 = vmatprep.subr.mxu0 0.0
    %212 = vmatpush1.msra.mxu0 %v112
    %213 = vmatprep.subr.mxu0 0.0
    %214 = vmatpush1.msra.mxu0 %v113
    %215 = vmatprep.subr.mxu0 0.0
    %216 = vmatpush1.msra.mxu0 %v114
    %217 = vmatprep.subr.mxu0 0.0
    %218 = vmatpush1.msra.mxu0 %v115
    %219 = vmatprep.mubr.f32.mxu0 %v81
    %220 = vmatmul.mubr.f32.gmra.mrb[0].mxu0 %v80
    %v221 = vpop.f32.mrb[0].mxu0
    %v222 = vadd.f32 %v153, %v221
    %v223 = vpop.f32.mrb[0].mxu0
    %224 = vdwg.mxu0
    %225 = vmatprep.subr.mxu0 0.0
    %226 = vmatpush1.msra.mxu0 %v116
    %227 = vmatprep.subr.mxu0 0.0
    %228 = vmatpush1.msra.mxu0 %v117
    %229 = vmatprep.subr.mxu0 0.0
    %230 = vmatpush1.msra.mxu0 %v118
    %231 = vmatprep.subr.mxu0 0.0
    %232 = vmatpush1.msra.mxu0 %v119
    %233 = vmatprep.subr.mxu0 0.0
    %234 = vmatpush1.msra.mxu0 %v120
    %235 = vmatprep.subr.mxu0 0.0
    %236 = vmatpush1.msra.mxu0 %v121
    %237 = vmatprep.subr.mxu0 0.0
    %238 = vmatpush1.msra.mxu0 %v122
    %239 = vmatprep.subr.mxu0 0.0
    %240 = vmatpush1.msra.mxu0 %v123
    %241 = vmatprep.subr.mxu0 0.0
    %242 = vmatpush1.msra.mxu0 %v124
    %243 = vmatprep.subr.mxu0 0.0
    %244 = vmatpush1.msra.mxu0 %v125
    %245 = vmatprep.subr.mxu0 0.0
    %246 = vmatpush1.msra.mxu0 %v126
    %247 = vmatprep.subr.mxu0 0.0
    %248 = vmatpush1.msra.mxu0 %v127
    %249 = vmatprep.subr.mxu0 0.0
    %250 = vmatpush1.msra.mxu0 %v128
    %251 = vmatprep.subr.mxu0 0.0
    %252 = vmatpush1.msra.mxu0 %v129
    %253 = vmatprep.subr.mxu0 0.0
    %254 = vmatpush1.msra.mxu0 %v130
    %255 = vmatprep.subr.mxu0 0.0
    %256 = vmatpush1.msra.mxu0 %v131
    %257 = vmatprep.subr.mxu0 0.0
    %258 = vmatpush1.msra.mxu0 %v132
    %259 = vmatprep.subr.mxu0 0.0
    %260 = vmatpush1.msra.mxu0 %v133
    %261 = vmatprep.subr.mxu0 0.0
    %262 = vmatpush1.msra.mxu0 %v134
    %263 = vmatprep.subr.mxu0 0.0
    %264 = vmatpush1.msra.mxu0 %v135
    %265 = vmatprep.subr.mxu0 0.0
    %266 = vmatpush1.msra.mxu0 %v136
    %267 = vmatprep.subr.mxu0 0.0
    %268 = vmatpush1.msra.mxu0 %v137
    %269 = vmatprep.subr.mxu0 0.0
    %270 = vmatpush1.msra.mxu0 %v138
    %271 = vmatprep.subr.mxu0 0.0
    %272 = vmatpush1.msra.mxu0 %v139
    %273 = vmatprep.subr.mxu0 0.0
    %274 = vmatpush1.msra.mxu0 %v140
    %275 = vmatprep.subr.mxu0 0.0
    %276 = vmatpush1.msra.mxu0 %v141
    %277 = vmatprep.subr.mxu0 0.0
    %278 = vmatpush1.msra.mxu0 %v142
    %279 = vmatprep.subr.mxu0 0.0
    %280 = vmatpush1.msra.mxu0 %v143
    %281 = vmatprep.subr.mxu0 0.0
    %282 = vmatpush1.msra.mxu0 %v144
    %283 = vmatprep.subr.mxu0 0.0
    %284 = vmatpush1.msra.mxu0 %v145
    %285 = vmatprep.subr.mxu0 0.0
    %286 = vmatpush1.msra.mxu0 %v146
    %287 = vmatprep.subr.mxu0 0.0
    %288 = vmatpush1.msra.mxu0 %v147
    %289 = vmatprep.mubr.f32.mxu0 %v83
    %290 = vmatmul.mubr.f32.gmra.mrb[0].mxu0 %v82
    %v291 = vpop.f32.mrb[0].mxu0
    %v292 = vadd.f32 %v222, %v291
    %v293 = vpop.f32.mrb[0].mxu0
    %294 = vdwg.mxu0
    %v295 = vmax.f32 %v292, 0.0
    %v296 = vld [vmem:[#allocation7] sm:$0xff]
    %v297 = vld [vmem:[#allocation7 + $0x8] sm:$0xff]
    %v298 = vld [vmem:[#allocation7 + $0x10] sm:$0xff]
    %v299 = vld [vmem:[#allocation7 + $0x18] sm:$0xff]
    %v300 = vld [vmem:[#allocation7 + $0x20] sm:$0xff]
    %v301 = vld [vmem:[#allocation7 + $0x28] sm:$0xff]
    %v302 = vld [vmem:[#allocation7 + $0x30] sm:$0xff]
    %v303 = vld [vmem:[#allocation7 + $0x38] sm:$0xff]
    %v304 = vld [vmem:[#allocation7 + $0x40] sm:$0xff]
    %v305 = vld [vmem:[#allocation7 + $0x48] sm:$0xff]
    %v306 = vld [vmem:[#allocation7 + $0x50] sm:$0xff]
    %v307 = vld [vmem:[#allocation7 + $0x58] sm:$0xff]
    %v308 = vld [vmem:[#allocation7 + $0x60] sm:$0xff]
    %v309 = vld [vmem:[#allocation7 + $0x68] sm:$0xff]
    %v310 = vld [vmem:[#allocation7 + $0x70] sm:$0xff]
    %v311 = vld [vmem:[#allocation7 + $0x78] sm:$0xff]
    %v312 = vld [vmem:[%s4] sm:$0x1]
    %v314 = vlaneseq
    %v315 = vshrl.u32 %v314, 7
    %v316 = vsub.s32 0, %v315
    %v317 = vrot.slane %v312, %v316
    %319 = vmatprep.subr.mxu0 0.0
    %320 = vmatpush1.msra.mxu0 %v296
    %321 = vmatprep.subr.mxu0 0.0
    %322 = vmatpush1.msra.mxu0 %v297
    %323 = vmatprep.subr.mxu0 0.0
    %324 = vmatpush1.msra.mxu0 %v298
    %325 = vmatprep.subr.mxu0 0.0
    %326 = vmatpush1.msra.mxu0 %v299
    %327 = vmatprep.subr.mxu0 0.0
    %328 = vmatpush1.msra.mxu0 %v300
    %329 = vmatprep.subr.mxu0 0.0
    %330 = vmatpush1.msra.mxu0 %v301
    %331 = vmatprep.subr.mxu0 0.0
    %332 = vmatpush1.msra.mxu0 %v302
    %333 = vmatprep.subr.mxu0 0.0
    %334 = vmatpush1.msra.mxu0 %v303
    %335 = vmatprep.subr.mxu0 0.0
    %336 = vmatpush1.msra.mxu0 %v304
    %337 = vmatprep.subr.mxu0 0.0
    %338 = vmatpush1.msra.mxu0 %v305
    %339 = vmatprep.subr.mxu0 0.0
    %340 = vmatpush1.msra.mxu0 %v306
    %341 = vmatprep.subr.mxu0 0.0
    %342 = vmatpush1.msra.mxu0 %v307
    %343 = vmatprep.subr.mxu0 0.0
    %344 = vmatpush1.msra.mxu0 %v308
    %345 = vmatprep.subr.mxu0 0.0
    %346 = vmatpush1.msra.mxu0 %v309
    %347 = vmatprep.subr.mxu0 0.0
    %348 = vmatpush1.msra.mxu0 %v310
    %349 = vmatprep.subr.mxu0 0.0
    %350 = vmatpush1.msra.mxu0 %v311
    %351 = vmatprep.subr.mxu0 0.0
    %352 = vmatpush1.msra.mxu0 0.0
    %353 = vmatprep.subr.mxu0 0.0
    %354 = vmatpush1.msra.mxu0 0.0
    %355 = vmatprep.subr.mxu0 0.0
    %356 = vmatpush1.msra.mxu0 0.0
    %357 = vmatprep.subr.mxu0 0.0
    %358 = vmatpush1.msra.mxu0 0.0
    %359 = vmatprep.subr.mxu0 0.0
    %360 = vmatpush1.msra.mxu0 0.0
    %361 = vmatprep.subr.mxu0 0.0
    %362 = vmatpush1.msra.mxu0 0.0
    %363 = vmatprep.subr.mxu0 0.0
    %364 = vmatpush1.msra.mxu0 0.0
    %365 = vmatprep.subr.mxu0 0.0
    %366 = vmatpush1.msra.mxu0 0.0
    %367 = vmatprep.subr.mxu0 0.0
    %368 = vmatpush1.msra.mxu0 0.0
    %369 = vmatprep.subr.mxu0 0.0
    %370 = vmatpush1.msra.mxu0 0.0
    %371 = vmatprep.subr.mxu0 0.0
    %372 = vmatpush1.msra.mxu0 0.0
    %373 = vmatprep.subr.mxu0 0.0
    %374 = vmatpush1.msra.mxu0 0.0
    %375 = vmatprep.subr.mxu0 0.0
    %376 = vmatpush1.msra.mxu0 0.0
    %377 = vmatprep.subr.mxu0 0.0
    %378 = vmatpush1.msra.mxu0 0.0
    %379 = vmatprep.subr.mxu0 0.0
    %380 = vmatpush1.msra.mxu0 0.0
    %381 = vmatprep.subr.mxu0 0.0
    %382 = vmatpush1.msra.mxu0 0.0
    %383 = vmatprep.mubr.f32.mxu0 0.0
    %384 = vmatmul.mubr.f32.gmra.mrb[0].mxu0 %v295
    %v385 = vpop.f32.mrb[0].mxu0
    %v386 = vadd.f32 %v317, %v385
    %v387 = vpop.f32.mrb[0].mxu0
    %388 = vdwg.mxu0
    %v389 = vmax.f32 %v386, 0.0
    %v390 = vld [vmem:[#allocation8] sm:$0xff]
    %v391 = vld [vmem:[#allocation8 + $0x8] sm:$0xff]
    %v392 = vld [vmem:[#allocation8 + $0x10] sm:$0xff]
    %v393 = vld [vmem:[#allocation8 + $0x18] sm:$0xff]
    %v394 = vld [vmem:[#allocation8 + $0x20] sm:$0xff]
    %v395 = vld [vmem:[#allocation8 + $0x28] sm:$0xff]
    %v396 = vld [vmem:[#allocation8 + $0x30] sm:$0xff]
    %v397 = vld [vmem:[#allocation8 + $0x38] sm:$0xff]
    %v398 = vld [vmem:[#allocation8 + $0x40] sm:$0xff]
    %v399 = vld [vmem:[#allocation8 + $0x48] sm:$0xff]
    %v400 = vld [vmem:[#allocation8 + $0x50] sm:$0xff]
    %v401 = vld [vmem:[#allocation8 + $0x58] sm:$0xff]
    %v402 = vld [vmem:[#allocation8 + $0x60] sm:$0xff]
    %v403 = vld [vmem:[#allocation8 + $0x68] sm:$0xff]
    %v404 = vld [vmem:[#allocation8 + $0x70] sm:$0xff]
    %v405 = vld [vmem:[#allocation8 + $0x78] sm:$0xff]
    %v406 = vld [vmem:[%s6] sm:$0x1]
    %v408 = vlaneseq
    %v409 = vshrl.u32 %v408, 7
    %v410 = vsub.s32 0, %v409
    %v411 = vrot.slane %v406, %v410
    %413 = vmatprep.subr.mxu0 0.0
    %414 = vmatpush1.msra.mxu0 %v390
    %415 = vmatprep.subr.mxu0 0.0
    %416 = vmatpush1.msra.mxu0 %v391
    %417 = vmatprep.subr.mxu0 0.0
    %418 = vmatpush1.msra.mxu0 %v392
    %419 = vmatprep.subr.mxu0 0.0
    %420 = vmatpush1.msra.mxu0 %v393
    %421 = vmatprep.subr.mxu0 0.0
    %422 = vmatpush1.msra.mxu0 %v394
    %423 = vmatprep.subr.mxu0 0.0
    %424 = vmatpush1.msra.mxu0 %v395
    %425 = vmatprep.subr.mxu0 0.0
    %426 = vmatpush1.msra.mxu0 %v396
    %427 = vmatprep.subr.mxu0 0.0
    %428 = vmatpush1.msra.mxu0 %v397
    %429 = vmatprep.subr.mxu0 0.0
    %430 = vmatpush1.msra.mxu0 %v398
    %431 = vmatprep.subr.mxu0 0.0
    %432 = vmatpush1.msra.mxu0 %v399
    %433 = vmatprep.subr.mxu0 0.0
    %434 = vmatpush1.msra.mxu0 %v400
    %435 = vmatprep.subr.mxu0 0.0
    %436 = vmatpush1.msra.mxu0 %v401
    %437 = vmatprep.subr.mxu0 0.0
    %438 = vmatpush1.msra.mxu0 %v402
    %439 = vmatprep.subr.mxu0 0.0
    %440 = vmatpush1.msra.mxu0 %v403
    %441 = vmatprep.subr.mxu0 0.0
    %442 = vmatpush1.msra.mxu0 %v404
    %443 = vmatprep.subr.mxu0 0.0
    %444 = vmatpush1.msra.mxu0 %v405
    %445 = vmatprep.subr.mxu0 0.0
    %446 = vmatpush1.msra.mxu0 0.0
    %447 = vmatprep.subr.mxu0 0.0
    %448 = vmatpush1.msra.mxu0 0.0
    %449 = vmatprep.subr.mxu0 0.0
    %450 = vmatpush1.msra.mxu0 0.0
    %451 = vmatprep.subr.mxu0 0.0
    %452 = vmatpush1.msra.mxu0 0.0
    %453 = vmatprep.subr.mxu0 0.0
    %454 = vmatpush1.msra.mxu0 0.0
    %455 = vmatprep.subr.mxu0 0.0
    %456 = vmatpush1.msra.mxu0 0.0
    %457 = vmatprep.subr.mxu0 0.0
    %458 = vmatpush1.msra.mxu0 0.0
    %459 = vmatprep.subr.mxu0 0.0
    %460 = vmatpush1.msra.mxu0 0.0
    %461 = vmatprep.subr.mxu0 0.0
    %462 = vmatpush1.msra.mxu0 0.0
    %463 = vmatprep.subr.mxu0 0.0
    %464 = vmatpush1.msra.mxu0 0.0
    %465 = vmatprep.subr.mxu0 0.0
    %466 = vmatpush1.msra.mxu0 0.0
    %467 = vmatprep.subr.mxu0 0.0
    %468 = vmatpush1.msra.mxu0 0.0
    %469 = vmatprep.subr.mxu0 0.0
    %470 = vmatpush1.msra.mxu0 0.0
    %471 = vmatprep.subr.mxu0 0.0
    %472 = vmatpush1.msra.mxu0 0.0
    %473 = vmatprep.subr.mxu0 0.0
    %474 = vmatpush1.msra.mxu0 0.0
    %475 = vmatprep.subr.mxu0 0.0
    %476 = vmatpush1.msra.mxu0 0.0
    %477 = vmatprep.mubr.f32.mxu0 0.0
    %478 = vmatmul.mubr.f32.gmra.mrb[0].mxu0 %v389
    %v479 = vpop.f32.mrb[0].mxu0
    %v480 = vadd.f32 %v411, %v479
    %v481 = vpop.f32.mrb[0].mxu0
    %482 = vdwg.mxu0
    %483 = vst [vmem:[#allocation10] sm:$0xff] %v480
    // Predicated region
    $region46: #{tpu_custom_call.1} parent=1 // pred_check
      _
    $region47: #{tpu_custom_call.1} parent=1 // pred_check_branch
      %485 = sbr.rel (0) target = $region49
    $region48: #{tpu_custom_call.1} parent=1 // pred_region
      %s487 = ssub.s32 128, 128
      %488 = vsyncadd [#allocation4], %s487
      %s490 = sshll.u32 [#allocation10], 4
      %s491 = int_to_ptr.vmem [resolvable:$true] %s490
      %493 = dma.vmem_to_hbm [thread:$0]  %s491, 128, %s7, [#allocation4]
    $region49: #{tpu_custom_call.1} parent=1 // pred_fallthru
      _
    // Predicated region
    $region50: #{tpu_custom_call.1} parent=1 // pred_check
      _
    $region51: #{tpu_custom_call.1} parent=1 // pred_check_branch
      %495 = sbr.rel (0) target = $region53
    $region52: #{tpu_custom_call.1} parent=1 // pred_region
      %496 = dma.done [#allocation4], 128
    $region53: #{tpu_custom_call.1} parent=1 // pred_fallthru
      _
    %497 = vsyncpa [#allocation3], 1
    %498 = vsyncpa [#allocation6], 1
    %499 = vsyncpa [#allocation9], 1
    %500 = vsyncpa [#allocation4], 1

</llo_original>
